<compile_context>
chip_gen: v7x
topology: tpu7x:2x2x1
jax: 0.10.0
libtpu: 0.0.40
codegen_flags: <defaults>
</compile_context>

<pallas_src>
import jax
import jax.numpy as jnp
from jax.experimental import pallas as pl
from jax.experimental.pallas import tpu as pltpu

N_CAT = 20
D_IN, D_H1, D_H2 = 100, 50, 20

LANE = 128      # padded hidden width (50 -> 128, 20 -> 128) so h1/h2 are lane-dense
TB_MAX = 2048   # max batch-tile rows per grid step (multiple of 8)


def _mlp_kernel(x_ref, w1_ref, b1_ref, w2_ref, b2_ref, w3_ref, b3_ref, o_ref):
    # fc1 + ReLU : (TB, 100) @ (100, 128) -> (TB, 128); padded lanes = ReLU(0+0) = 0.
    x = x_ref[...].astype(jnp.bfloat16)
    h1 = jnp.dot(x, w1_ref[...], preferred_element_type=jnp.float32)
    h1 = jnp.maximum(h1 + b1_ref[...], 0.0)
    # fc2 + ReLU : (TB, 128) @ (128, 128) -> (TB, 128)
    h2 = jnp.dot(h1.astype(jnp.bfloat16), w2_ref[...], preferred_element_type=jnp.float32)
    h2 = jnp.maximum(h2 + b2_ref[...], 0.0)
    # fc3 (logits): (TB, 128) @ (128, 20) -> (TB, 20); stored directly, no post-slice.
    out = jnp.dot(h2.astype(jnp.bfloat16), w3_ref[...], preferred_element_type=jnp.float32)
    o_ref[...] = (out + b3_ref[...]).astype(o_ref.dtype)


def _pad2(a, rows, cols, dtype):
    r, c = a.shape
    return jnp.pad(a.astype(dtype), ((0, rows - r), (0, cols - c)))


def prepare_params(params):
    """One-time padding/casting of the Linear params for the kernel (hoisted out of the
    per-call path).  Weights -> bf16 with hidden dims zero-padded to 128 lanes; biases
    stay f32 (bias-add/ReLU run in f32 on the VPU)."""
    return dict(
        w1=_pad2(params["w1"], D_IN, LANE, jnp.bfloat16),   # (100, 128)
        b1=_pad2(params["b1"], 1, LANE, jnp.float32),        # (1, 128)
        w2=_pad2(params["w2"], LANE, LANE, jnp.bfloat16),    # (128, 128)
        b2=_pad2(params["b2"], 1, LANE, jnp.float32),        # (1, 128)
        w3=_pad2(params["w3"], LANE, N_CAT, jnp.bfloat16),   # (128, 20)
        b3=params["b3"].astype(jnp.float32),                 # (1, 20)
    )


def _dim_semantics(num_steps):
    """CORE_PARALLEL (real dual-TensorCore sharding) only where it helps: v7x, >=2 steps."""
    kind = ""
    try:
        kind = jax.devices()[0].device_kind.lower()
    except Exception:
        pass
    if num_steps >= 2 and ("v7" in kind or "7x" in kind) and hasattr(pltpu, "CORE_PARALLEL"):
        return (pltpu.CORE_PARALLEL,)
    return ("parallel",)


def textnet_forward(x, prepared, *, tb_max=TB_MAX):
    """x: [B, 100] (f32 or bf16). prepared: output of prepare_params(). Returns [B, 20] f32."""
    B = x.shape[0]
    TB = min(tb_max, ((B + 7) // 8) * 8)          # multiple of 8, <= tb_max
    num_steps = pl.cdiv(B, TB)                    # partial edge block handled by Pallas

    act_spec = pl.BlockSpec((TB, D_IN), lambda i: (i, 0))       # streamed per grid step
    out_spec = pl.BlockSpec((TB, N_CAT), lambda i: (i, 0))      # direct (B, 20) output
    # Constant index_maps -> weights/biases DMA'd once, VMEM-resident across steps.
    w1_spec = pl.BlockSpec((D_IN, LANE), lambda i: (0, 0))
    w2_spec = pl.BlockSpec((LANE, LANE), lambda i: (0, 0))
    w3_spec = pl.BlockSpec((LANE, N_CAT), lambda i: (0, 0))
    bL_spec = pl.BlockSpec((1, LANE), lambda i: (0, 0))
    b3_spec = pl.BlockSpec((1, N_CAT), lambda i: (0, 0))

    return pl.pallas_call(
        _mlp_kernel,
        out_shape=jax.ShapeDtypeStruct((B, N_CAT), jnp.float32),
        grid=(num_steps,),
        in_specs=[act_spec, w1_spec, bL_spec, w2_spec, bL_spec, w3_spec, b3_spec],
        out_specs=out_spec,
        compiler_params=pltpu.CompilerParams(
            dimension_semantics=_dim_semantics(num_steps),
            vmem_limit_bytes=32 * 1024 * 1024,    # lets v5e run the same big tiles
        ),
    )(x, prepared["w1"], prepared["b1"], prepared["w2"], prepared["b2"],
      prepared["w3"], prepared["b3"])


def init_params(key):
    """Deterministic init mimicking PyTorch nn.Linear default (uniform +-1/sqrt(fan_in))."""
    ks = jax.random.split(key, 6)

    def linear(kw, kb, fan_in, fan_out):
        bound = 1.0 / (fan_in ** 0.5)
        w = jax.random.uniform(kw, (fan_in, fan_out), jnp.float32, -bound, bound)
        b = jax.random.uniform(kb, (1, fan_out), jnp.float32, -bound, bound)
        return w, b

    w1, b1 = linear(ks[0], ks[1], D_IN, D_H1)
    w2, b2 = linear(ks[2], ks[3], D_H1, D_H2)
    w3, b3 = linear(ks[4], ks[5], D_H2, N_CAT)
    return dict(w1=w1, b1=b1, w2=w2, b2=b2, w3=w3, b3=b3)


def reference_forward_f32(x, p):
    h1 = jnp.maximum(x @ p["w1"] + p["b1"], 0.0)
    h2 = jnp.maximum(h1 @ p["w2"] + p["b2"], 0.0)
    return h2 @ p["w3"] + p["b3"]


def reference_forward_mixed(x, p):
    """Same precision recipe as the kernel: bf16 MXU inputs, f32 accumulation/VPU."""
    bf, f32 = jnp.bfloat16, jnp.float32
    h1 = jnp.dot(x.astype(bf), p["w1"].astype(bf), preferred_element_type=f32) + p["b1"]
    h1 = jnp.maximum(h1, 0.0)
    h2 = jnp.dot(h1.astype(bf), p["w2"].astype(bf), preferred_element_type=f32) + p["b2"]
    h2 = jnp.maximum(h2, 0.0)
    return jnp.dot(h2.astype(bf), p["w3"].astype(bf), preferred_element_type=f32) + p["b3"]


if __name__ == "__main__":
    key = jax.random.PRNGKey(0)
    k_params, k_x1, k_x2 = jax.random.split(key, 3)

    params = init_params(k_params)
    prepared = prepare_params(params)          # one-time, outside the per-call path

    fwd = jax.jit(textnet_forward, static_argnames=("tb_max",))

    # Case 1: small batch, single grid step (TB == 8).
    x_small = jax.random.normal(k_x1, (8, D_IN), jnp.float32)
    out_small = jax.block_until_ready(fwd(x_small, prepared))
    assert out_small.shape == (8, N_CAT)
    assert jnp.allclose(out_small, reference_forward_mixed(x_small, params),
                        atol=1e-3, rtol=1e-3)
    assert jnp.allclose(out_small, reference_forward_f32(x_small, params),
                        atol=5e-2, rtol=5e-2)

    # Case 2: batch not a multiple of the tile -> multi-step grid with a partial
    # edge block (37 rows, TB=16 -> grid of 3, last block only 5 valid rows).
    x_odd = jax.random.normal(k_x2, (37, D_IN), jnp.float32)
    out_odd = jax.block_until_ready(fwd(x_odd, prepared, tb_max=16))
    assert out_odd.shape == (37, N_CAT)
    assert jnp.allclose(out_odd, reference_forward_mixed(x_odd, params),
                        atol=1e-3, rtol=1e-3)
    assert jnp.allclose(out_odd, reference_forward_f32(x_odd, params),
                        atol=5e-2, rtol=5e-2)

    print("KERNEL_OK")
</pallas_src>

<mosaic_0001>
module attributes {stable_mosaic.version = 11 : i64} {
  func.func @_mlp_kernel(%arg0: i32, %arg1: memref<8x100xf32, #tpu.memory_space<vmem>>, %arg2: memref<100x128xbf16, #tpu.memory_space<vmem>>, %arg3: memref<1x128xf32, #tpu.memory_space<vmem>>, %arg4: memref<128x128xbf16, #tpu.memory_space<vmem>>, %arg5: memref<1x128xf32, #tpu.memory_space<vmem>>, %arg6: memref<128x20xbf16, #tpu.memory_space<vmem>>, %arg7: memref<1x20xf32, #tpu.memory_space<vmem>>, %arg8: memref<8x20xf32, #tpu.memory_space<vmem>>) attributes {dimension_semantics = [#tpu.dimension_semantics<parallel>], iteration_bounds = array<i64: 1>, scalar_prefetch = 0 : i64, scratch_operands = 0 : i64, tpu.core_type = #tpu.core_type<tc>, window_params = [{transform_indices = @transform_0, window_bounds = array<i64: 8, 100>}, {pipeline_mode = #tpu.pipeline_mode<synchronous>, transform_indices = @transform_1, window_bounds = array<i64: 100, 128>}, {pipeline_mode = #tpu.pipeline_mode<synchronous>, transform_indices = @transform_2, window_bounds = array<i64: 1, 128>}, {pipeline_mode = #tpu.pipeline_mode<synchronous>, transform_indices = @transform_3, window_bounds = array<i64: 128, 128>}, {pipeline_mode = #tpu.pipeline_mode<synchronous>, transform_indices = @transform_4, window_bounds = array<i64: 1, 128>}, {pipeline_mode = #tpu.pipeline_mode<synchronous>, transform_indices = @transform_5, window_bounds = array<i64: 128, 20>}, {pipeline_mode = #tpu.pipeline_mode<synchronous>, transform_indices = @transform_6, window_bounds = array<i64: 1, 20>}, {transform_indices = @transform_7, window_bounds = array<i64: 8, 20>}]} {
    %c0 = arith.constant 0 : index
    %c0_0 = arith.constant 0 : index
    %0 = vector.load %arg1[%c0, %c0_0] : memref<8x100xf32, #tpu.memory_space<vmem>>, vector<8x100xf32>
    %1 = arith.truncf %0 : vector<8x100xf32> to vector<8x100xbf16>
    %c0_1 = arith.constant 0 : index
    %c0_2 = arith.constant 0 : index
    %2 = vector.load %arg2[%c0_1, %c0_2] : memref<100x128xbf16, #tpu.memory_space<vmem>>, vector<100x128xbf16>
    %cst = arith.constant dense<0.000000e+00> : vector<8x128xf32>
    %3 = tpu.matmul %1, %2, %cst {dimension_numbers = #tpu.dot_dimension_numbers<[1], [0], [0], [1], [0, 0, 1, 1], [], []>} : vector<8x100xbf16>, vector<100x128xbf16>, vector<8x128xf32> -> vector<8x128xf32>
    %c0_3 = arith.constant 0 : index
    %c0_4 = arith.constant 0 : index
    %4 = vector.load %arg3[%c0_3, %c0_4] : memref<1x128xf32, #tpu.memory_space<vmem>>, vector<1x128xf32>
    %5 = vector.broadcast %4 : vector<1x128xf32> to vector<8x128xf32>
    %6 = arith.addf %3, %5 : vector<8x128xf32>
    %cst_5 = arith.constant 0.000000e+00 : f32
    %7 = vector.broadcast %cst_5 : f32 to vector<8x128xf32>
    %8 = arith.maximumf %6, %7 : vector<8x128xf32>
    %9 = arith.truncf %8 : vector<8x128xf32> to vector<8x128xbf16>
    %c0_6 = arith.constant 0 : index
    %c0_7 = arith.constant 0 : index
    %10 = vector.load %arg4[%c0_6, %c0_7] : memref<128x128xbf16, #tpu.memory_space<vmem>>, vector<128x128xbf16>
    %cst_8 = arith.constant dense<0.000000e+00> : vector<8x128xf32>
    %11 = tpu.matmul %9, %10, %cst_8 {dimension_numbers = #tpu.dot_dimension_numbers<[1], [0], [0], [1], [0, 0, 1, 1], [], []>} : vector<8x128xbf16>, vector<128x128xbf16>, vector<8x128xf32> -> vector<8x128xf32>
    %c0_9 = arith.constant 0 : index
    %c0_10 = arith.constant 0 : index
    %12 = vector.load %arg5[%c0_9, %c0_10] : memref<1x128xf32, #tpu.memory_space<vmem>>, vector<1x128xf32>
    %13 = vector.broadcast %12 : vector<1x128xf32> to vector<8x128xf32>
    %14 = arith.addf %11, %13 : vector<8x128xf32>
    %cst_11 = arith.constant 0.000000e+00 : f32
    %15 = vector.broadcast %cst_11 : f32 to vector<8x128xf32>
    %16 = arith.maximumf %14, %15 : vector<8x128xf32>
    %17 = arith.truncf %16 : vector<8x128xf32> to vector<8x128xbf16>
    %c0_12 = arith.constant 0 : index
    %c0_13 = arith.constant 0 : index
    %18 = vector.load %arg6[%c0_12, %c0_13] : memref<128x20xbf16, #tpu.memory_space<vmem>>, vector<128x20xbf16>
    %cst_14 = arith.constant dense<0.000000e+00> : vector<8x20xf32>
    %19 = tpu.matmul %17, %18, %cst_14 {dimension_numbers = #tpu.dot_dimension_numbers<[1], [0], [0], [1], [0, 0, 1, 1], [], []>} : vector<8x128xbf16>, vector<128x20xbf16>, vector<8x20xf32> -> vector<8x20xf32>
    %c0_15 = arith.constant 0 : index
    %c0_16 = arith.constant 0 : index
    %20 = vector.load %arg7[%c0_15, %c0_16] : memref<1x20xf32, #tpu.memory_space<vmem>>, vector<1x20xf32>
    %21 = vector.broadcast %20 : vector<1x20xf32> to vector<8x20xf32>
    %22 = arith.addf %19, %21 : vector<8x20xf32>
    %c0_17 = arith.constant 0 : index
    %c0_18 = arith.constant 0 : index
    %23 = vector.load %arg8[%c0_17, %c0_18] : memref<8x20xf32, #tpu.memory_space<vmem>>, vector<8x20xf32>
    tpu.vector_store %arg8[%c0_17, %c0_18], %22 {strides = array<i32>} : memref<8x20xf32, #tpu.memory_space<vmem>>, vector<8x20xf32>,
    return
  }
  func.func @transform_0(%arg0: i32) -> (i32, i32) {
    %c0_i32 = arith.constant 0 : i32
    %c0_i32_0 = arith.constant 0 : i32
    return %arg0, %c0_i32 : i32, i32
  }
  func.func @transform_1(%arg0: i32) -> (i32, i32) {
    %c0_i32 = arith.constant 0 : i32
    %c0_i32_0 = arith.constant 0 : i32
    %c0_i32_1 = arith.constant 0 : i32
    return %c0_i32, %c0_i32_0 : i32, i32
  }
  func.func @transform_2(%arg0: i32) -> (i32, i32) {
    %c0_i32 = arith.constant 0 : i32
    %c0_i32_0 = arith.constant 0 : i32
    %c0_i32_1 = arith.constant 0 : i32
    return %c0_i32, %c0_i32_0 : i32, i32
  }
  func.func @transform_3(%arg0: i32) -> (i32, i32) {
    %c0_i32 = arith.constant 0 : i32
    %c0_i32_0 = arith.constant 0 : i32
    %c0_i32_1 = arith.constant 0 : i32
    return %c0_i32, %c0_i32_0 : i32, i32
  }
  func.func @transform_4(%arg0: i32) -> (i32, i32) {
    %c0_i32 = arith.constant 0 : i32
    %c0_i32_0 = arith.constant 0 : i32
    %c0_i32_1 = arith.constant 0 : i32
    return %c0_i32, %c0_i32_0 : i32, i32
  }
  func.func @transform_5(%arg0: i32) -> (i32, i32) {
    %c0_i32 = arith.constant 0 : i32
    %c0_i32_0 = arith.constant 0 : i32
    %c0_i32_1 = arith.constant 0 : i32
    return %c0_i32, %c0_i32_0 : i32, i32
  }
  func.func @transform_6(%arg0: i32) -> (i32, i32) {
    %c0_i32 = arith.constant 0 : i32
    %c0_i32_0 = arith.constant 0 : i32
    %c0_i32_1 = arith.constant 0 : i32
    return %c0_i32, %c0_i32_0 : i32, i32
  }
  func.func @transform_7(%arg0: i32) -> (i32, i32) {
    %c0_i32 = arith.constant 0 : i32
    %c0_i32_0 = arith.constant 0 : i32
    return %arg0, %c0_i32 : i32, i32
  }
}

</mosaic_0001>

<llo_original>
// kernel: textnet_forward.1
$region0: #{textnet_forward.1}
  #allocation0 [shape = 'u32[]', space=smem, size = 0x4, offset = 0x4, fixed_abs, tag = 'smem constant byte address 0x4 - core index']
  #allocation1 [shape = 'u32[144,128]{1,0:T(1,128)}', space=vmem, size = 0x12000, scoped, tag = 'internal scratch']
  %s0 = inlined_call_operand.vmem [shape: f32[8,100], index: 0, kind: input, shape index: {}]
  %s1 = inlined_call_operand.hbm [shape: bf16[100,128], index: 1, kind: input, shape index: {}]
  %s2 = inlined_call_operand.vmem [shape: f32[1,128], index: 2, kind: input, shape index: {}]
  %s3 = inlined_call_operand.vmem [shape: bf16[128,128], index: 3, kind: input, shape index: {}]
  %s4 = inlined_call_operand.vmem [shape: f32[1,128], index: 4, kind: input, shape index: {}]
  %s5 = inlined_call_operand.vmem [shape: bf16[128,20], index: 5, kind: input, shape index: {}]
  %s6 = inlined_call_operand.vmem [shape: f32[1,20], index: 6, kind: input, shape index: {}]
  %s7 = inlined_call_operand.hbm [shape: f32[8,20], index: 7, kind: output, shape index: {}]
  %s8 = sld [smem:[#allocation0]]
  $region42: #{textnet_forward.1} parent=0
    _
  %s10 = ssub.s32 1, %s8
  %s11 = scalar_select 0, %s10, %s8
  $region1: #{textnet_forward.1} parent=0
    #allocation2 [shape = 'u8[26624]{0}', space=vmem, size = 0x6800, scoped, tag = 'input window, operand 1, single buffered']
    #allocation3 [shape = 's32[1]{0}', space=sflag, size = 0x4, scoped, tag = 'scoped memory for textnet_forward.1']
    #allocation4 [shape = 's32[1]{0}', space=sflag, size = 0x4, scoped, tag = 'scoped memory for textnet_forward.1']
    #allocation5 [shape = 'u8[4096]{0}', space=vmem, size = 0x1000, scoped, tag = 'output window, operand 0, single buffered']
    %12 = vsyncpa [#allocation3], 0
    %13 = vsyncpa [#allocation4], 0
    // Predicated region
    $region2: #{textnet_forward.1} parent=1 // pred_check
      _
    $region3: #{textnet_forward.1} parent=1 // pred_check_branch
      %15 = sbr.rel (0) target = $region5
    $region4: #{textnet_forward.1} parent=1 // pred_region
      _
    $region5: #{textnet_forward.1} parent=1 // pred_fallthru
      _
    // Predicated region
    $region6: #{textnet_forward.1} parent=1 // pred_check
      _
    $region7: #{textnet_forward.1} parent=1 // pred_check_branch
      %17 = sbr.rel (0) target = $region9
    $region8: #{textnet_forward.1} parent=1 // pred_region
      %s19 = ssub.s32 832, 832
      %20 = vsyncadd [#allocation3], %s19
      %s21 = sshll.u32 [#allocation2], 4
      %s22 = int_to_ptr.vmem [resolvable:$true] %s21
      %27 = dma.hbm_to_vmem [thread:$0]  %s1, 832, %s22, [#allocation3], 64, 64, 4
    $region9: #{textnet_forward.1} parent=1 // pred_fallthru
      _
    // Predicated region
    $region10: #{textnet_forward.1} parent=1 // pred_check
      _
    $region11: #{textnet_forward.1} parent=1 // pred_check_branch
      %29 = sbr.rel (0) target = $region13
    $region12: #{textnet_forward.1} parent=1 // pred_region
      _
    $region13: #{textnet_forward.1} parent=1 // pred_fallthru
      _
    // Predicated region
    $region14: #{textnet_forward.1} parent=1 // pred_check
      _
    $region15: #{textnet_forward.1} parent=1 // pred_check_branch
      %31 = sbr.rel (0) target = $region17
    $region16: #{textnet_forward.1} parent=1 // pred_region
      _
    $region17: #{textnet_forward.1} parent=1 // pred_fallthru
      _
    // Predicated region
    $region18: #{textnet_forward.1} parent=1 // pred_check
      _
    $region19: #{textnet_forward.1} parent=1 // pred_check_branch
      %33 = sbr.rel (0) target = $region21
    $region20: #{textnet_forward.1} parent=1 // pred_region
      _
    $region21: #{textnet_forward.1} parent=1 // pred_fallthru
      _
    // Predicated region
    $region22: #{textnet_forward.1} parent=1 // pred_check
      _
    $region23: #{textnet_forward.1} parent=1 // pred_check_branch
      %35 = sbr.rel (0) target = $region25
    $region24: #{textnet_forward.1} parent=1 // pred_region
      _
    $region25: #{textnet_forward.1} parent=1 // pred_fallthru
      _
    // Predicated region
    $region26: #{textnet_forward.1} parent=1 // pred_check
      _
    $region27: #{textnet_forward.1} parent=1 // pred_check_branch
      %37 = sbr.rel (0) target = $region29
    $region28: #{textnet_forward.1} parent=1 // pred_region
      _
    $region29: #{textnet_forward.1} parent=1 // pred_fallthru
      _
    // Predicated region
    $region30: #{textnet_forward.1} parent=1 // pred_check
      _
    $region31: #{textnet_forward.1} parent=1 // pred_check_branch
      %39 = sbr.rel (0) target = $region33
    $region32: #{textnet_forward.1} parent=1 // pred_region
      %40 = dma.done [#allocation3], 832
    $region33: #{textnet_forward.1} parent=1 // pred_fallthru
      _
    %v42 = vld [vmem:[%s0] sm:$0xff]
    %v43 = vpack.c.bf16 %v42, %v42
    %v44 = vld [vmem:[#allocation2] sm:$0xf]
    %v45 = vld [vmem:[#allocation2 + $0x4] sm:$0xf]
    %v46 = vld [vmem:[#allocation2 + $0x8] sm:$0xf]
    %v47 = vld [vmem:[#allocation2 + $0xc] sm:$0xf]
    %v48 = vld [vmem:[#allocation2 + $0x10] sm:$0xf]
    %v49 = vld [vmem:[#allocation2 + $0x14] sm:$0xf]
    %v50 = vld [vmem:[#allocation2 + $0x18] sm:$0xf]
    %v51 = vld [vmem:[#allocation2 + $0x1c] sm:$0xf]
    %v52 = vld [vmem:[#allocation2 + $0x20] sm:$0xf]
    %v53 = vld [vmem:[#allocation2 + $0x24] sm:$0xf]
    %v54 = vld [vmem:[#allocation2 + $0x28] sm:$0xf]
    %v55 = vld [vmem:[#allocation2 + $0x2c] sm:$0xf]
    %v56 = vld [vmem:[#allocation2 + $0x30] sm:$0x3]
    %v57 = vld [vmem:[%s2] sm:$0x1]
    %v59 = vlaneseq
    %v60 = vshrl.u32 %v59, 7
    %v61 = vsub.s32 0, %v60
    %v62 = vrot.slane %v57, %v61
    %v77 = vunpack.c.l.b16 %v44
    %v78 = vunpack.c.l.b16 %v45
    %v79 = vunpack.c.l.b16 %v46
    %v80 = vunpack.c.l.b16 %v47
    %v81 = vunpack.c.l.b16 %v48
    %v82 = vunpack.c.l.b16 %v49
    %v83 = vunpack.c.l.b16 %v50
    %v84 = vunpack.c.l.b16 %v51
    %v85 = vunpack.c.l.b16 %v52
    %v86 = vunpack.c.l.b16 %v53
    %v87 = vunpack.c.l.b16 %v54
    %v88 = vunpack.c.l.b16 %v55
    %v89 = vunpack.c.l.b16 %v56
    %v90 = vpack.c.b16 %v78, %v77
    %v91 = vpack.c.b16 %v80, %v79
    %v92 = vpack.c.b16 %v82, %v81
    %v93 = vpack.c.b16 %v84, %v83
    %v94 = vpack.c.b16 %v86, %v85
    %v95 = vpack.c.b16 %v88, %v87
    %v96 = vpack.c.b16 %v89, %v89
    %vm103 = vcmask 818176
    %v105 = vsel %vm103, %v43, 0
    %vm107 = vcmask 1041408
    %v109 = vsel %vm107, %v96, 0
    %111 = vmatprep.subr.bf16.mxu0 0
    %112 = vmatpush1.bf16.msra.mxu0 %v90
    %113 = vmatprep.subr.bf16.mxu0 0
    %114 = vmatpush1.bf16.msra.mxu0 %v91
    %115 = vmatprep.subr.bf16.mxu0 0
    %116 = vmatpush1.bf16.msra.mxu0 %v92
    %117 = vmatprep.subr.bf16.mxu0 0
    %118 = vmatpush1.bf16.msra.mxu0 %v93
    %119 = vmatprep.subr.bf16.mxu0 0
    %120 = vmatpush1.bf16.msra.mxu0 %v94
    %121 = vmatprep.subr.bf16.mxu0 0
    %122 = vmatpush1.bf16.msra.mxu0 %v95
    %123 = vmatprep.subr.bf16.mxu0 0
    %124 = vmatpush1.bf16.msra.mxu0 %v109
    %125 = vmatprep.subr.bf16.mxu0 0
    %126 = vmatpush1.bf16.msra.mxu0 0
    %127 = vmatprep.subr.bf16.mxu0 0
    %128 = vmatpush1.bf16.msra.mxu0 0
    %129 = vmatprep.subr.bf16.mxu0 0
    %130 = vmatpush1.bf16.msra.mxu0 0
    %131 = vmatprep.subr.bf16.mxu0 0
    %132 = vmatpush1.bf16.msra.mxu0 0
    %133 = vmatprep.subr.bf16.mxu0 0
    %134 = vmatpush1.bf16.msra.mxu0 0
    %135 = vmatprep.subr.bf16.mxu0 0
    %136 = vmatpush1.bf16.msra.mxu0 0
    %137 = vmatprep.subr.bf16.mxu0 0
    %138 = vmatpush1.bf16.msra.mxu0 0
    %139 = vmatprep.subr.bf16.mxu0 0
    %140 = vmatpush1.bf16.msra.mxu0 0
    %141 = vmatprep.subr.bf16.mxu0 0
    %142 = vmatpush1.bf16.msra.mxu0 0
    %143 = vmatprep.mubr.bf16.mxu0 0
    %144 = vmatmul.mubr.bf16.gmra.mrb[0].mxu0 %v105
    %v145 = vpop.f32.mrb[0].mxu0
    %v146 = vadd.f32 %v62, %v145
    %v147 = vpop.f32.mrb[0].mxu0
    %v148 = vpop.f32.mrb[0].mxu0
    %v149 = vpop.f32.mrb[0].mxu0
    %150 = vdwg.mxu0
    %v151 = vmax.f32 %v146, 0.0
    %v152 = vpack.c.bf16 %v151, %v151
    %v153 = vld [vmem:[%s3] sm:$0xf]
    %v154 = vld [vmem:[%s3 + $0x4] sm:$0xf]
    %v155 = vld [vmem:[%s3 + $0x8] sm:$0xf]
    %v156 = vld [vmem:[%s3 + $0xc] sm:$0xf]
    %v157 = vld [vmem:[%s3 + $0x10] sm:$0xf]
    %v158 = vld [vmem:[%s3 + $0x14] sm:$0xf]
    %v159 = vld [vmem:[%s3 + $0x18] sm:$0xf]
    %v160 = vld [vmem:[%s3 + $0x1c] sm:$0xf]
    %v161 = vld [vmem:[%s3 + $0x20] sm:$0xf]
    %v162 = vld [vmem:[%s3 + $0x24] sm:$0xf]
    %v163 = vld [vmem:[%s3 + $0x28] sm:$0xf]
    %v164 = vld [vmem:[%s3 + $0x2c] sm:$0xf]
    %v165 = vld [vmem:[%s3 + $0x30] sm:$0xf]
    %v166 = vld [vmem:[%s3 + $0x34] sm:$0xf]
    %v167 = vld [vmem:[%s3 + $0x38] sm:$0xf]
    %v168 = vld [vmem:[%s3 + $0x3c] sm:$0xf]
    %v169 = vld [vmem:[%s4] sm:$0x1]
    %v171 = vlaneseq
    %v172 = vshrl.u32 %v171, 7
    %v173 = vsub.s32 0, %v172
    %v174 = vrot.slane %v169, %v173
    %v192 = vunpack.c.l.b16 %v153
    %v193 = vunpack.c.l.b16 %v154
    %v194 = vunpack.c.l.b16 %v155
    %v195 = vunpack.c.l.b16 %v156
    %v196 = vunpack.c.l.b16 %v157
    %v197 = vunpack.c.l.b16 %v158
    %v198 = vunpack.c.l.b16 %v159
    %v199 = vunpack.c.l.b16 %v160
    %v200 = vunpack.c.l.b16 %v161
    %v201 = vunpack.c.l.b16 %v162
    %v202 = vunpack.c.l.b16 %v163
    %v203 = vunpack.c.l.b16 %v164
    %v204 = vunpack.c.l.b16 %v165
    %v205 = vunpack.c.l.b16 %v166
    %v206 = vunpack.c.l.b16 %v167
    %v207 = vunpack.c.l.b16 %v168
    %v208 = vpack.c.b16 %v193, %v192
    %v209 = vpack.c.b16 %v195, %v194
    %v210 = vpack.c.b16 %v197, %v196
    %v211 = vpack.c.b16 %v199, %v198
    %v212 = vpack.c.b16 %v201, %v200
    %v213 = vpack.c.b16 %v203, %v202
    %v214 = vpack.c.b16 %v205, %v204
    %v215 = vpack.c.b16 %v207, %v206
    %224 = vmatprep.subr.bf16.mxu0 0
    %225 = vmatpush1.bf16.msra.mxu0 %v208
    %226 = vmatprep.subr.bf16.mxu0 0
    %227 = vmatpush1.bf16.msra.mxu0 %v209
    %228 = vmatprep.subr.bf16.mxu0 0
    %229 = vmatpush1.bf16.msra.mxu0 %v210
    %230 = vmatprep.subr.bf16.mxu0 0
    %231 = vmatpush1.bf16.msra.mxu0 %v211
    %232 = vmatprep.subr.bf16.mxu0 0
    %233 = vmatpush1.bf16.msra.mxu0 %v212
    %234 = vmatprep.subr.bf16.mxu0 0
    %235 = vmatpush1.bf16.msra.mxu0 %v213
    %236 = vmatprep.subr.bf16.mxu0 0
    %237 = vmatpush1.bf16.msra.mxu0 %v214
    %238 = vmatprep.subr.bf16.mxu0 0
    %239 = vmatpush1.bf16.msra.mxu0 %v215
    %240 = vmatprep.subr.bf16.mxu0 0
    %241 = vmatpush1.bf16.msra.mxu0 0
    %242 = vmatprep.subr.bf16.mxu0 0
    %243 = vmatpush1.bf16.msra.mxu0 0
    %244 = vmatprep.subr.bf16.mxu0 0
    %245 = vmatpush1.bf16.msra.mxu0 0
    %246 = vmatprep.subr.bf16.mxu0 0
    %247 = vmatpush1.bf16.msra.mxu0 0
    %248 = vmatprep.subr.bf16.mxu0 0
    %249 = vmatpush1.bf16.msra.mxu0 0
    %250 = vmatprep.subr.bf16.mxu0 0
    %251 = vmatpush1.bf16.msra.mxu0 0
    %252 = vmatprep.subr.bf16.mxu0 0
    %253 = vmatpush1.bf16.msra.mxu0 0
    %254 = vmatprep.subr.bf16.mxu0 0
    %255 = vmatpush1.bf16.msra.mxu0 0
    %256 = vmatprep.mubr.bf16.mxu0 0
    %257 = vmatmul.mubr.bf16.gmra.mrb[0].mxu0 %v152
    %v258 = vpop.f32.mrb[0].mxu0
    %v259 = vadd.f32 %v174, %v258
    %v260 = vpop.f32.mrb[0].mxu0
    %v261 = vpop.f32.mrb[0].mxu0
    %v262 = vpop.f32.mrb[0].mxu0
    %263 = vdwg.mxu0
    %v264 = vmax.f32 %v259, 0.0
    %v265 = vpack.c.bf16 %v264, %v264
    %v266 = vld [vmem:[%s5] sm:$0xf]
    %v267 = vld [vmem:[%s5 + $0x4] sm:$0xf]
    %v268 = vld [vmem:[%s5 + $0x8] sm:$0xf]
    %v269 = vld [vmem:[%s5 + $0xc] sm:$0xf]
    %v270 = vld [vmem:[%s5 + $0x10] sm:$0xf]
    %v271 = vld [vmem:[%s5 + $0x14] sm:$0xf]
    %v272 = vld [vmem:[%s5 + $0x18] sm:$0xf]
    %v273 = vld [vmem:[%s5 + $0x1c] sm:$0xf]
    %v274 = vld [vmem:[%s5 + $0x20] sm:$0xf]
    %v275 = vld [vmem:[%s5 + $0x24] sm:$0xf]
    %v276 = vld [vmem:[%s5 + $0x28] sm:$0xf]
    %v277 = vld [vmem:[%s5 + $0x2c] sm:$0xf]
    %v278 = vld [vmem:[%s5 + $0x30] sm:$0xf]
    %v279 = vld [vmem:[%s5 + $0x34] sm:$0xf]
    %v280 = vld [vmem:[%s5 + $0x38] sm:$0xf]
    %v281 = vld [vmem:[%s5 + $0x3c] sm:$0xf]
    %v282 = vld [vmem:[%s6] sm:$0x1]
    %v284 = vlaneseq
    %v285 = vshrl.u32 %v284, 7
    %v286 = vsub.s32 0, %v285
    %v287 = vrot.slane %v282, %v286
    %v305 = vunpack.c.l.b16 %v266
    %v306 = vunpack.c.l.b16 %v267
    %v307 = vunpack.c.l.b16 %v268
    %v308 = vunpack.c.l.b16 %v269
    %v309 = vunpack.c.l.b16 %v270
    %v310 = vunpack.c.l.b16 %v271
    %v311 = vunpack.c.l.b16 %v272
    %v312 = vunpack.c.l.b16 %v273
    %v313 = vunpack.c.l.b16 %v274
    %v314 = vunpack.c.l.b16 %v275
    %v315 = vunpack.c.l.b16 %v276
    %v316 = vunpack.c.l.b16 %v277
    %v317 = vunpack.c.l.b16 %v278
    %v318 = vunpack.c.l.b16 %v279
    %v319 = vunpack.c.l.b16 %v280
    %v320 = vunpack.c.l.b16 %v281
    %v321 = vpack.c.b16 %v306, %v305
    %v322 = vpack.c.b16 %v308, %v307
    %v323 = vpack.c.b16 %v310, %v309
    %v324 = vpack.c.b16 %v312, %v311
    %v325 = vpack.c.b16 %v314, %v313
    %v326 = vpack.c.b16 %v316, %v315
    %v327 = vpack.c.b16 %v318, %v317
    %v328 = vpack.c.b16 %v320, %v319
    %337 = vmatprep.subr.bf16.mxu0 0
    %338 = vmatpush1.bf16.msra.mxu0 %v321
    %339 = vmatprep.subr.bf16.mxu0 0
    %340 = vmatpush1.bf16.msra.mxu0 %v322
    %341 = vmatprep.subr.bf16.mxu0 0
    %342 = vmatpush1.bf16.msra.mxu0 %v323
    %343 = vmatprep.subr.bf16.mxu0 0
    %344 = vmatpush1.bf16.msra.mxu0 %v324
    %345 = vmatprep.subr.bf16.mxu0 0
    %346 = vmatpush1.bf16.msra.mxu0 %v325
    %347 = vmatprep.subr.bf16.mxu0 0
    %348 = vmatpush1.bf16.msra.mxu0 %v326
    %349 = vmatprep.subr.bf16.mxu0 0
    %350 = vmatpush1.bf16.msra.mxu0 %v327
    %351 = vmatprep.subr.bf16.mxu0 0
    %352 = vmatpush1.bf16.msra.mxu0 %v328
    %353 = vmatprep.subr.bf16.mxu0 0
    %354 = vmatpush1.bf16.msra.mxu0 0
    %355 = vmatprep.subr.bf16.mxu0 0
    %356 = vmatpush1.bf16.msra.mxu0 0
    %357 = vmatprep.subr.bf16.mxu0 0
    %358 = vmatpush1.bf16.msra.mxu0 0
    %359 = vmatprep.subr.bf16.mxu0 0
    %360 = vmatpush1.bf16.msra.mxu0 0
    %361 = vmatprep.subr.bf16.mxu0 0
    %362 = vmatpush1.bf16.msra.mxu0 0
    %363 = vmatprep.subr.bf16.mxu0 0
    %364 = vmatpush1.bf16.msra.mxu0 0
    %365 = vmatprep.subr.bf16.mxu0 0
    %366 = vmatpush1.bf16.msra.mxu0 0
    %367 = vmatprep.subr.bf16.mxu0 0
    %368 = vmatpush1.bf16.msra.mxu0 0
    %369 = vmatprep.mubr.bf16.mxu0 0
    %370 = vmatmul.mubr.bf16.gmra.mrb[0].mxu0 %v265
    %v371 = vpop.f32.mrb[0].mxu0
    %v372 = vadd.f32 %v287, %v371
    %v373 = vpop.f32.mrb[0].mxu0
    %v374 = vpop.f32.mrb[0].mxu0
    %v375 = vpop.f32.mrb[0].mxu0
    %376 = vdwg.mxu0
    %vm377 = vcmask 162816
    %378 = vst.msk [vmem:[#allocation5] sm:$0xff] %vm377, %v372
    // Predicated region
    $region34: #{textnet_forward.1} parent=1 // pred_check
      _
    $region35: #{textnet_forward.1} parent=1 // pred_check_branch
      %380 = sbr.rel (0) target = $region37
    $region36: #{textnet_forward.1} parent=1 // pred_region
      %s382 = ssub.s32 128, 128
      %383 = vsyncadd [#allocation4], %s382
      %s385 = sshll.u32 [#allocation5], 4
      %s386 = int_to_ptr.vmem [resolvable:$true] %s385
      %388 = dma.vmem_to_hbm [thread:$0]  %s386, 128, %s7, [#allocation4]
    $region37: #{textnet_forward.1} parent=1 // pred_fallthru
      _
    // Predicated region
    $region38: #{textnet_forward.1} parent=1 // pred_check
      _
    $region39: #{textnet_forward.1} parent=1 // pred_check_branch
      %390 = sbr.rel (0) target = $region41
    $region40: #{textnet_forward.1} parent=1 // pred_region
      %391 = dma.done [#allocation4], 128
    $region41: #{textnet_forward.1} parent=1 // pred_fallthru
      _
    %392 = vsyncpa [#allocation3], 1
    %393 = vsyncpa [#allocation4], 1

</llo_original>
